<compile_context>
chip_gen: v7x
topology: tpu7x:2x2x1
jax: 0.10.0
libtpu: 0.0.40
codegen_flags: <defaults>
</compile_context>

<pallas_src>
import jax
import jax.numpy as jnp
from jax import lax
from jax.experimental import pallas as pl
from jax.experimental.pallas import tpu as pltpu


def pcnn_kernel(emb_ref, pid_ref, w_ref, b3_ref, out_ref):
    # emb_ref : (TB, L, W)  f32 embedding tile (batch-blocked; the last block
    #                       may be ragged -> trailing rows are unspecified and
    #                       never reach a valid output row)
    # pid_ref : (TB, L)     int32 piece id in {0, 1, 2} per token
    # w_ref   : (W, 3*H)    f32 conv weight, the 3 kernel rows fused along N
    # b3_ref  : (1, 3*H)    f32 hidden-major (bias - 100)
    # out_ref : (TB, 3*H)   f32 relu(piecewise max pool), hidden-major (h*3+p)
    TB, L, W = emb_ref.shape
    H3 = out_ref.shape[-1]
    H = H3 // 3
    M = TB * L

    # One MXU pass for all three kernel rows: (TB*L, W) @ (W, 3*H).
    # L, W are the full array dims, so the reshape is layout-free.
    emb2d = emb_ref[...].reshape(M, W)
    fused = jnp.dot(emb2d, w_ref[...], preferred_element_type=jnp.float32)
    f0 = fused[:, 0 * H:1 * H]          # emb[t] . w_row0
    f1 = fused[:, 1 * H:2 * H]          # emb[t] . w_row1
    f2 = fused[:, 2 * H:3 * H]          # emb[t] . w_row2

    # Conv2d(1->H, kernel=(3, W), stride=1, padding=(1, 0)):
    #   conv[b, t] = f0[b, t-1] + f1[b, t] + f2[b, t+1]   (zero outside [0, L))
    # Shifts are sublane rolls of the flat (M, H) arrays (XLU).  shift=M-1 is
    # the -1-step rotate; per-vreg cost is a single constant sublane rotate
    # plus merge, identical to shift=1 (only the vreg renumbering differs).
    # Rows that would wrap across a batch-element (or ragged-block) boundary
    # are exactly t==0 / t==L-1, which the conv zero padding zeroes anyway.
    t = lax.broadcasted_iota(jnp.int32, (M, 1), 0) % L
    f0s = jnp.where(t == 0, 0.0, pltpu.roll(f0, shift=1, axis=0))
    f2s = jnp.where(t == L - 1, 0.0, pltpu.roll(f2, shift=M - 1, axis=0))
    conv = (f1 + f0s + f2s).reshape(TB, L, H)        # bias hoisted to the end

    # Piecewise max pooling with exact torch arithmetic:
    #   pooled_p[b, h] = max_t( conv[b, t, h] + 100 * [pid[b, t] == p] )
    c100 = conv + 100.0                              # single add, reused 3x
    pid = pid_ref[...].reshape(TB, L, 1)
    pooled = [jnp.max(jnp.where(pid == p, c100, conv), axis=1)   # (TB, H)
              for p in range(3)]

    # Scatter the three (TB, H) pooled pieces into hidden-major lanes h*3 + p
    # with tiny one-hot matmuls (MXU is otherwise idle; exact since every
    # product is x*1.0 or x*0.0), then apply (bias - 100) and ReLU.  This
    # makes the stored block the final layout -> no wrapper-side transpose.
    hh = lax.broadcasted_iota(jnp.int32, (H, H3), 0)
    cc = lax.broadcasted_iota(jnp.int32, (H, H3), 1)
    out = b3_ref[...]                                # (1, 3H) broadcast
    for p in range(3):
        scat = (cc == hh * 3 + p).astype(jnp.float32)            # (H, 3H)
        out = out + jnp.dot(pooled[p], scat,
                            preferred_element_type=jnp.float32)
    out_ref[...] = jnp.maximum(out, 0.0)


def _pick_batch_tile(B: int) -> int:
    """Fixed large batch tile.

    256 rows amortize the ~0.35 us per-grid-step overhead while keeping the
    double-buffered VMEM footprint at a few MiB (fits v5e's 16 MiB scoped
    default and v7x's 64 MiB VMEM).  When the tile does not cover the whole
    batch it must be a multiple of 8 (sublane dim of the (TB, 3H) output
    block); the last grid block is simply ragged — no wrapper-side padding.
    """
    return B if B <= 256 else 256


def pcnn_forward(embedding, piece_ids, weight, bias, *, window_size=3,
                 batch_tile=None):
    """embedding: (B, L, W) f32; piece_ids: (B, L) int32 in {0,1,2} — the
    compact equivalent of the module's mask (mask == 100*one_hot(piece_ids,3));
    weight: (H, 1, window_size, W) Conv2d weight; bias: (H,).
    Returns (B, 3*H) f32, hidden-major, matching torch's x.view(-1, hidden*3)."""
    B, L, W = embedding.shape
    H = weight.shape[0]
    assert weight.shape == (H, 1, window_size, W)
    assert window_size == 3, "PCNN uses window_size == 3"
    assert piece_ids.shape == (B, L)
    piece_ids = piece_ids.astype(jnp.int32)

    TB = batch_tile if batch_tile is not None else _pick_batch_tile(B)
    if TB < B:
        assert TB % 8 == 0, "batch tile must be a multiple of 8 when < B"
    nblk = pl.cdiv(B, TB)          # ragged last block when TB does not divide B

    # (H, 1, 3, W) -> (W, 3*H) with w_cat[w, k*H + h] == weight[h, 0, k, w]:
    # the three kernel rows fused along the matmul N dimension.
    w_cat = jnp.transpose(weight[:, 0, :, :], (2, 1, 0)).reshape(W, 3 * H)
    # Hidden-major (bias - 100): b3[0, h*3 + p] = bias[h] - 100.
    b3 = jnp.repeat(bias.astype(jnp.float32) - 100.0, 3).reshape(1, 3 * H)

    # TODO(synk): optionally stream embedding/w_cat as bf16 (MXU path only) to
    # halve the dominant HBM stream; kept f32 here to match the reference
    # bit-for-bit within 1e-4.
    return pl.pallas_call(
        pcnn_kernel,
        out_shape=jax.ShapeDtypeStruct((B, 3 * H), jnp.float32),
        grid_spec=pltpu.PrefetchScalarGridSpec(
            num_scalar_prefetch=0,
            grid=(nblk,),
            in_specs=[
                pl.BlockSpec((TB, L, W), lambda i: (i, 0, 0)),   # embedding
                pl.BlockSpec((TB, L), lambda i: (i, 0)),         # piece ids
                pl.BlockSpec((W, 3 * H), lambda i: (0, 0)),      # fused weight
                pl.BlockSpec((1, 3 * H), lambda i: (0, 0)),      # bias - 100
            ],
            out_specs=pl.BlockSpec((TB, 3 * H), lambda i: (i, 0)),
        ),
        compiler_params=pltpu.CompilerParams(
            dimension_semantics=("parallel",)),
    )(embedding, piece_ids, w_cat, b3)


# ----------------------------- reference path -----------------------------

def pcnn_reference(embedding, mask, weight, bias):
    """Pure-JAX reference mirroring the PyTorch module op-for-op."""
    B, L, W = embedding.shape
    H = weight.shape[0]
    x = embedding[:, None, :, :]                                      # (B,1,L,W)
    conv = lax.conv_general_dilated(
        x, weight, window_strides=(1, 1), padding=((1, 1), (0, 0)),
        dimension_numbers=("NCHW", "OIHW", "NCHW"))                   # (B,H,L,1)
    conv = conv + bias[None, :, None, None]
    m = mask[:, None, :, :]                                           # (B,1,L,3)
    pooled = jnp.max(m + conv, axis=2) - 100.0                        # (B,H,3)
    return jax.nn.relu(pooled.reshape(B, H * 3))


def make_piece_ids(L, pos1, pos2):
    t = jnp.arange(L)
    return (t > pos1).astype(jnp.int32) + (t > pos2).astype(jnp.int32)


def mask_from_piece_ids(piece_ids):
    # (B, L) int32 -> (B, L, 3) float 0/100 mask, the form the torch module uses.
    return (piece_ids[..., None] == jnp.arange(3)).astype(jnp.float32) * 100.0


if __name__ == "__main__":
    # Config-consistent small shapes: max_length=16, word_size=16, pos_size=8
    # -> in_width W=32, hidden_size=32, window_size=3.
    word_size, pos_size, hidden, window = 16, 8, 32, 3
    L = 16
    W = word_size + 2 * pos_size

    key = jax.random.PRNGKey(0)
    k1, k2, k3, k4 = jax.random.split(key, 4)
    weight = jax.random.normal(k2, (hidden, 1, window, W), dtype=jnp.float32) * 0.1
    bias = jax.random.normal(k3, (hidden,), dtype=jnp.float32) * 0.1

    fwd = jax.jit(pcnn_forward, static_argnames=("window_size", "batch_tile"))

    # Case 1: tiny batch -> single grid block covering the whole batch.
    B = 2
    embedding = jax.random.normal(k1, (B, L, W), dtype=jnp.float32)
    piece_ids = jnp.stack([make_piece_ids(L, 5, 10),
                           make_piece_ids(L, 3, 12)], axis=0)          # (B, L)
    out = jax.block_until_ready(fwd(embedding, piece_ids, weight, bias))
    ref = jax.block_until_ready(
        pcnn_reference(embedding, mask_from_piece_ids(piece_ids), weight, bias))
    assert out.shape == (B, hidden * 3)
    assert jnp.allclose(out, ref, atol=1e-4, rtol=1e-4), (
        f"case 1 max abs err = {jnp.max(jnp.abs(out - ref))}")

    # Case 2: ragged multi-block grid (B=20, TB=8 -> 3 blocks, last one ragged,
    # no wrapper-side padding).
    B2 = 20
    embedding2 = jax.random.normal(k4, (B2, L, W), dtype=jnp.float32)
    piece_ids2 = jnp.stack([make_piece_ids(L, 3 + (i % 7), 9 + (i % 5))
                            for i in range(B2)], axis=0)               # (B2, L)
    out2 = jax.block_until_ready(fwd(embedding2, piece_ids2, weight, bias,
                                     batch_tile=8))
    ref2 = jax.block_until_ready(
        pcnn_reference(embedding2, mask_from_piece_ids(piece_ids2), weight, bias))
    assert out2.shape == (B2, hidden * 3)
    assert jnp.allclose(out2, ref2, atol=1e-4, rtol=1e-4), (
        f"case 2 max abs err = {jnp.max(jnp.abs(out2 - ref2))}")

    print("KERNEL_OK")
</pallas_src>

<mosaic_0001>
module attributes {stable_mosaic.version = 11 : i64} {
  func.func @pcnn_kernel(%arg0: i32, %arg1: memref<2x16x32xf32, #tpu.memory_space<vmem>>, %arg2: memref<2x16xi32, #tpu.memory_space<vmem>>, %arg3: memref<32x96xf32, #tpu.memory_space<vmem>>, %arg4: memref<1x96xf32, #tpu.memory_space<vmem>>, %arg5: memref<2x96xf32, #tpu.memory_space<vmem>>) attributes {dimension_semantics = [#tpu.dimension_semantics<parallel>], iteration_bounds = array<i64: 1>, scalar_prefetch = 0 : i64, scratch_operands = 0 : i64, tpu.core_type = #tpu.core_type<tc>, window_params = [{transform_indices = @transform_0, window_bounds = array<i64: 2, 16, 32>}, {transform_indices = @transform_1, window_bounds = array<i64: 2, 16>}, {pipeline_mode = #tpu.pipeline_mode<synchronous>, transform_indices = @transform_2, window_bounds = array<i64: 32, 96>}, {pipeline_mode = #tpu.pipeline_mode<synchronous>, transform_indices = @transform_3, window_bounds = array<i64: 1, 96>}, {transform_indices = @transform_4, window_bounds = array<i64: 2, 96>}]} {
    %c0 = arith.constant 0 : index
    %c0_0 = arith.constant 0 : index
    %c0_1 = arith.constant 0 : index
    %0 = vector.load %arg1[%c0, %c0_0, %c0_1] : memref<2x16x32xf32, #tpu.memory_space<vmem>>, vector<2x16x32xf32>
    %1 = vector.shape_cast %0 : vector<2x16x32xf32> to vector<32x32xf32>
    %c0_2 = arith.constant 0 : index
    %c0_3 = arith.constant 0 : index
    %2 = vector.load %arg3[%c0_2, %c0_3] : memref<32x96xf32, #tpu.memory_space<vmem>>, vector<32x96xf32>
    %cst = arith.constant dense<0.000000e+00> : vector<32x96xf32>
    %3 = tpu.matmul %1, %2, %cst {dimension_numbers = #tpu.dot_dimension_numbers<[1], [0], [0], [1], [0, 0, 1, 1], [], []>} : vector<32x32xf32>, vector<32x96xf32>, vector<32x96xf32> -> vector<32x96xf32>
    %4 = vector.extract_strided_slice %3 {offsets = [0, 0], sizes = [32, 32], strides = [1, 1]} : vector<32x96xf32> to vector<32x32xf32>
    %5 = vector.extract_strided_slice %3 {offsets = [0, 32], sizes = [32, 32], strides = [1, 1]} : vector<32x96xf32> to vector<32x32xf32>
    %6 = vector.extract_strided_slice %3 {offsets = [0, 64], sizes = [32, 32], strides = [1, 1]} : vector<32x96xf32> to vector<32x32xf32>
    %7 = tpu.iota {dimensions = array<i32: 0>} : vector<32x1xi32>
    %c16_i32 = arith.constant 16 : i32
    %c0_i32 = arith.constant 0 : i32
    %8 = arith.cmpi eq, %c16_i32, %c0_i32 : i32
    %c1_i32 = arith.constant 1 : i32
    %9 = arith.select %8, %c1_i32, %c16_i32 : i32
    %10 = vector.broadcast %9 : i32 to vector<32x1xi32>
    %11 = arith.remsi %7, %10 : vector<32x1xi32>
    %c0_i32_4 = arith.constant 0 : i32
    %12 = vector.broadcast %c0_i32_4 : i32 to vector<32x1xi32>
    %13 = arith.cmpi ne, %11, %12 : vector<32x1xi32>
    %c0_i32_5 = arith.constant 0 : i32
    %14 = vector.broadcast %c0_i32_5 : i32 to vector<32x1xi32>
    %15 = arith.cmpi slt, %11, %14 : vector<32x1xi32>
    %c0_i32_6 = arith.constant 0 : i32
    %16 = arith.cmpi slt, %9, %c0_i32_6 : i32
    %17 = vector.broadcast %16 : i1 to vector<32x1xi1>
    %18 = vector.broadcast %17 : vector<32x1xi1> to vector<32x1xi1>
    %19 = arith.xori %15, %18 : vector<32x1xi1>
    %20 = arith.andi %19, %13 : vector<32x1xi1>
    %21 = vector.broadcast %9 : i32 to vector<32x1xi32>
    %22 = arith.addi %11, %21 : vector<32x1xi32>
    %23 = arith.select %20, %22, %11 : vector<32x1xi1>, vector<32x1xi32>
    %c0_i32_7 = arith.constant 0 : i32
    %24 = vector.broadcast %c0_i32_7 : i32 to vector<32x1xi32>
    %25 = arith.cmpi eq, %23, %24 : vector<32x1xi32>
    %c1_i32_8 = arith.constant 1 : i32
    %26 = tpu.dynamic_rotate %4 by %c1_i32_8 dim 0 : vector<32x32xf32>, i32 -> vector<32x32xf32>
    %cst_9 = arith.constant 0.000000e+00 : f32
    %27 = vector.shape_cast %25 : vector<32x1xi1> to vector<32x1xi1>
    %28 = vector.broadcast %27 : vector<32x1xi1> to vector<32x32xi1>
    %29 = vector.broadcast %cst_9 : f32 to vector<32x32xf32>
    %30 = arith.select %28, %29, %26 : vector<32x32xi1>, vector<32x32xf32>
    %c15_i32 = arith.constant 15 : i32
    %31 = vector.broadcast %c15_i32 : i32 to vector<32x1xi32>
    %32 = arith.cmpi eq, %23, %31 : vector<32x1xi32>
    %c31_i32 = arith.constant 31 : i32
    %33 = tpu.dynamic_rotate %6 by %c31_i32 dim 0 : vector<32x32xf32>, i32 -> vector<32x32xf32>
    %cst_10 = arith.constant 0.000000e+00 : f32
    %34 = vector.shape_cast %32 : vector<32x1xi1> to vector<32x1xi1>
    %35 = vector.broadcast %34 : vector<32x1xi1> to vector<32x32xi1>
    %36 = vector.broadcast %cst_10 : f32 to vector<32x32xf32>
    %37 = arith.select %35, %36, %33 : vector<32x32xi1>, vector<32x32xf32>
    %38 = arith.addf %5, %30 : vector<32x32xf32>
    %39 = arith.addf %38, %37 : vector<32x32xf32>
    %40 = vector.shape_cast %39 : vector<32x32xf32> to vector<2x16x32xf32>
    %cst_11 = arith.constant 1.000000e+02 : f32
    %41 = vector.broadcast %cst_11 : f32 to vector<2x16x32xf32>
    %42 = arith.addf %40, %41 : vector<2x16x32xf32>
    %c0_12 = arith.constant 0 : index
    %c0_13 = arith.constant 0 : index
    %43 = vector.load %arg2[%c0_12, %c0_13] : memref<2x16xi32, #tpu.memory_space<vmem>>, vector<2x16xi32>
    %44 = vector.shape_cast %43 : vector<2x16xi32> to vector<2x16x1xi32>
    %c0_i32_14 = arith.constant 0 : i32
    %45 = vector.broadcast %c0_i32_14 : i32 to vector<2x16x1xi32>
    %46 = arith.cmpi eq, %44, %45 : vector<2x16x1xi32>
    %47 = vector.shape_cast %46 : vector<2x16x1xi1> to vector<2x16x1xi1>
    %48 = vector.broadcast %47 : vector<2x16x1xi1> to vector<2x16x32xi1>
    %49 = arith.select %48, %42, %40 : vector<2x16x32xi1>, vector<2x16x32xf32>
    %cst_15 = arith.constant dense<0xFF800000> : vector<2x32xf32>
    %50 = vector.multi_reduction <maximumf>, %49, %cst_15 [1] : vector<2x16x32xf32> to vector<2x32xf32>
    %c1_i32_16 = arith.constant 1 : i32
    %51 = vector.broadcast %c1_i32_16 : i32 to vector<2x16x1xi32>
    %52 = arith.cmpi eq, %44, %51 : vector<2x16x1xi32>
    %53 = vector.shape_cast %52 : vector<2x16x1xi1> to vector<2x16x1xi1>
    %54 = vector.broadcast %53 : vector<2x16x1xi1> to vector<2x16x32xi1>
    %55 = arith.select %54, %42, %40 : vector<2x16x32xi1>, vector<2x16x32xf32>
    %cst_17 = arith.constant dense<0xFF800000> : vector<2x32xf32>
    %56 = vector.multi_reduction <maximumf>, %55, %cst_17 [1] : vector<2x16x32xf32> to vector<2x32xf32>
    %c2_i32 = arith.constant 2 : i32
    %57 = vector.broadcast %c2_i32 : i32 to vector<2x16x1xi32>
    %58 = arith.cmpi eq, %44, %57 : vector<2x16x1xi32>
    %59 = vector.shape_cast %58 : vector<2x16x1xi1> to vector<2x16x1xi1>
    %60 = vector.broadcast %59 : vector<2x16x1xi1> to vector<2x16x32xi1>
    %61 = arith.select %60, %42, %40 : vector<2x16x32xi1>, vector<2x16x32xf32>
    %cst_18 = arith.constant dense<0xFF800000> : vector<2x32xf32>
    %62 = vector.multi_reduction <maximumf>, %61, %cst_18 [1] : vector<2x16x32xf32> to vector<2x32xf32>
    %63 = tpu.iota {dimensions = array<i32: 0>} : vector<32x96xi32>
    %64 = tpu.iota {dimensions = array<i32: 1>} : vector<32x96xi32>
    %c0_19 = arith.constant 0 : index
    %c0_20 = arith.constant 0 : index
    %65 = vector.load %arg4[%c0_19, %c0_20] : memref<1x96xf32, #tpu.memory_space<vmem>>, vector<1x96xf32>
    %c3_i32 = arith.constant 3 : i32
    %66 = vector.broadcast %c3_i32 : i32 to vector<32x96xi32>
    %67 = arith.muli %63, %66 : vector<32x96xi32>
    %c0_i32_21 = arith.constant 0 : i32
    %68 = vector.broadcast %c0_i32_21 : i32 to vector<32x96xi32>
    %69 = arith.addi %67, %68 : vector<32x96xi32>
    %70 = arith.cmpi eq, %64, %69 : vector<32x96xi32>
    %71 = arith.extui %70 : vector<32x96xi1> to vector<32x96xi32>
    %72 = arith.sitofp %71 : vector<32x96xi32> to vector<32x96xf32>
    %cst_22 = arith.constant dense<0.000000e+00> : vector<2x96xf32>
    %73 = tpu.matmul %50, %72, %cst_22 {dimension_numbers = #tpu.dot_dimension_numbers<[1], [0], [0], [1], [0, 0, 1, 1], [], []>} : vector<2x32xf32>, vector<32x96xf32>, vector<2x96xf32> -> vector<2x96xf32>
    %74 = vector.broadcast %65 : vector<1x96xf32> to vector<2x96xf32>
    %75 = arith.addf %74, %73 : vector<2x96xf32>
    %c3_i32_23 = arith.constant 3 : i32
    %76 = vector.broadcast %c3_i32_23 : i32 to vector<32x96xi32>
    %77 = arith.muli %63, %76 : vector<32x96xi32>
    %c1_i32_24 = arith.constant 1 : i32
    %78 = vector.broadcast %c1_i32_24 : i32 to vector<32x96xi32>
    %79 = arith.addi %77, %78 : vector<32x96xi32>
    %80 = arith.cmpi eq, %64, %79 : vector<32x96xi32>
    %81 = arith.extui %80 : vector<32x96xi1> to vector<32x96xi32>
    %82 = arith.sitofp %81 : vector<32x96xi32> to vector<32x96xf32>
    %cst_25 = arith.constant dense<0.000000e+00> : vector<2x96xf32>
    %83 = tpu.matmul %56, %82, %cst_25 {dimension_numbers = #tpu.dot_dimension_numbers<[1], [0], [0], [1], [0, 0, 1, 1], [], []>} : vector<2x32xf32>, vector<32x96xf32>, vector<2x96xf32> -> vector<2x96xf32>
    %84 = arith.addf %75, %83 : vector<2x96xf32>
    %c3_i32_26 = arith.constant 3 : i32
    %85 = vector.broadcast %c3_i32_26 : i32 to vector<32x96xi32>
    %86 = arith.muli %63, %85 : vector<32x96xi32>
    %c2_i32_27 = arith.constant 2 : i32
    %87 = vector.broadcast %c2_i32_27 : i32 to vector<32x96xi32>
    %88 = arith.addi %86, %87 : vector<32x96xi32>
    %89 = arith.cmpi eq, %64, %88 : vector<32x96xi32>
    %90 = arith.extui %89 : vector<32x96xi1> to vector<32x96xi32>
    %91 = arith.sitofp %90 : vector<32x96xi32> to vector<32x96xf32>
    %cst_28 = arith.constant dense<0.000000e+00> : vector<2x96xf32>
    %92 = tpu.matmul %62, %91, %cst_28 {dimension_numbers = #tpu.dot_dimension_numbers<[1], [0], [0], [1], [0, 0, 1, 1], [], []>} : vector<2x32xf32>, vector<32x96xf32>, vector<2x96xf32> -> vector<2x96xf32>
    %93 = arith.addf %84, %92 : vector<2x96xf32>
    %cst_29 = arith.constant 0.000000e+00 : f32
    %94 = vector.broadcast %cst_29 : f32 to vector<2x96xf32>
    %95 = arith.maximumf %93, %94 : vector<2x96xf32>
    %c0_30 = arith.constant 0 : index
    %c0_31 = arith.constant 0 : index
    %96 = vector.load %arg5[%c0_30, %c0_31] : memref<2x96xf32, #tpu.memory_space<vmem>>, vector<2x96xf32>
    tpu.vector_store %arg5[%c0_30, %c0_31], %95 {strides = array<i32>} : memref<2x96xf32, #tpu.memory_space<vmem>>, vector<2x96xf32>,
    return
  }
  func.func @transform_0(%arg0: i32) -> (i32, i32, i32) {
    %c0_i32 = arith.constant 0 : i32
    %c0_i32_0 = arith.constant 0 : i32
    %c0_i32_1 = arith.constant 0 : i32
    return %arg0, %c0_i32, %c0_i32_0 : i32, i32, i32
  }
  func.func @transform_1(%arg0: i32) -> (i32, i32) {
    %c0_i32 = arith.constant 0 : i32
    %c0_i32_0 = arith.constant 0 : i32
    return %arg0, %c0_i32 : i32, i32
  }
  func.func @transform_2(%arg0: i32) -> (i32, i32) {
    %c0_i32 = arith.constant 0 : i32
    %c0_i32_0 = arith.constant 0 : i32
    %c0_i32_1 = arith.constant 0 : i32
    return %c0_i32, %c0_i32_0 : i32, i32
  }
  func.func @transform_3(%arg0: i32) -> (i32, i32) {
    %c0_i32 = arith.constant 0 : i32
    %c0_i32_0 = arith.constant 0 : i32
    %c0_i32_1 = arith.constant 0 : i32
    return %c0_i32, %c0_i32_0 : i32, i32
  }
  func.func @transform_4(%arg0: i32) -> (i32, i32) {
    %c0_i32 = arith.constant 0 : i32
    %c0_i32_0 = arith.constant 0 : i32
    return %arg0, %c0_i32 : i32, i32
  }
}

</mosaic_0001>

<llo_original>
// kernel: pcnn_forward.1
$region0: #{pcnn_forward.1}
  #allocation0 [shape = 'u32[]', space=smem, size = 0x4, offset = 0x4, fixed_abs, tag = 'smem constant byte address 0x4 - core index']
  #allocation1 [shape = 'u32[144,128]{1,0:T(1,128)}', space=vmem, size = 0x12000, scoped, tag = 'internal scratch']
  %s0 = inlined_call_operand.vmem [shape: f32[2,16,32], index: 0, kind: input, shape index: {}]
  %s1 = inlined_call_operand.vmem [shape: s32[2,16], index: 1, kind: input, shape index: {}]
  %s2 = inlined_call_operand.vmem [shape: f32[32,96], index: 2, kind: input, shape index: {}]
  %s3 = inlined_call_operand.vmem [shape: f32[1,96], index: 3, kind: input, shape index: {}]
  %s4 = inlined_call_operand.hbm [shape: f32[2,96], index: 4, kind: output, shape index: {}]
  %s5 = sld [smem:[#allocation0]]
  $region26: #{pcnn_forward.1} parent=0
    _
  %s7 = ssub.s32 1, %s5
  %s8 = scalar_select 0, %s7, %s5
  $region1: #{pcnn_forward.1} parent=0
    #allocation2 [shape = 'u8[1024]{0}', space=vmem, size = 0x400, scoped, tag = 'output window, operand 0, single buffered']
    #allocation3 [shape = 's32[1]{0}', space=sflag, size = 0x4, scoped, tag = 'scoped memory for pcnn_forward.1']
    %9 = vsyncpa [#allocation3], 0
    // Predicated region
    $region2: #{pcnn_forward.1} parent=1 // pred_check
      _
    $region3: #{pcnn_forward.1} parent=1 // pred_check_branch
      %11 = sbr.rel (0) target = $region5
    $region4: #{pcnn_forward.1} parent=1 // pred_region
      _
    $region5: #{pcnn_forward.1} parent=1 // pred_fallthru
      _
    // Predicated region
    $region6: #{pcnn_forward.1} parent=1 // pred_check
      _
    $region7: #{pcnn_forward.1} parent=1 // pred_check_branch
      %13 = sbr.rel (0) target = $region9
    $region8: #{pcnn_forward.1} parent=1 // pred_region
      _
    $region9: #{pcnn_forward.1} parent=1 // pred_fallthru
      _
    // Predicated region
    $region10: #{pcnn_forward.1} parent=1 // pred_check
      _
    $region11: #{pcnn_forward.1} parent=1 // pred_check_branch
      %15 = sbr.rel (0) target = $region13
    $region12: #{pcnn_forward.1} parent=1 // pred_region
      _
    $region13: #{pcnn_forward.1} parent=1 // pred_fallthru
      _
    // Predicated region
    $region14: #{pcnn_forward.1} parent=1 // pred_check
      _
    $region15: #{pcnn_forward.1} parent=1 // pred_check_branch
      %17 = sbr.rel (0) target = $region17
    $region16: #{pcnn_forward.1} parent=1 // pred_region
      _
    $region17: #{pcnn_forward.1} parent=1 // pred_fallthru
      _
    %v18 = vld [vmem:[%s0] sm:$0xff]
    %v19 = vld [vmem:[%s0 + $0x8] sm:$0xff]
    %v20 = vld [vmem:[%s0 + $0x10] sm:$0xff]
    %v21 = vld [vmem:[%s0 + $0x18] sm:$0xff]
    %v22 = vld [vmem:[%s2] sm:$0xff]
    %v23 = vld [vmem:[%s2 + $0x8] sm:$0xff]
    %v24 = vld [vmem:[%s2 + $0x10] sm:$0xff]
    %v25 = vld [vmem:[%s2 + $0x18] sm:$0xff]
    %vm26 = vcmask 261120
    %v28 = vsel %vm26, %v18, 0
    %v31 = vsel %vm26, %v19, 0
    %v34 = vsel %vm26, %v20, 0
    %v37 = vsel %vm26, %v21, 0
    %39 = vmatprep.subr.mxu0 0.0
    %40 = vmatpush1.msra.mxu0 %v22
    %41 = vmatprep.subr.mxu0 0.0
    %42 = vmatpush1.msra.mxu0 %v23
    %43 = vmatprep.subr.mxu0 0.0
    %44 = vmatpush1.msra.mxu0 %v24
    %45 = vmatprep.subr.mxu0 0.0
    %46 = vmatpush1.msra.mxu0 %v25
    %47 = vmatprep.subr.mxu0 0.0
    %48 = vmatpush1.msra.mxu0 0.0
    %49 = vmatprep.subr.mxu0 0.0
    %50 = vmatpush1.msra.mxu0 0.0
    %51 = vmatprep.subr.mxu0 0.0
    %52 = vmatpush1.msra.mxu0 0.0
    %53 = vmatprep.subr.mxu0 0.0
    %54 = vmatpush1.msra.mxu0 0.0
    %55 = vmatprep.subr.mxu0 0.0
    %56 = vmatpush1.msra.mxu0 0.0
    %57 = vmatprep.subr.mxu0 0.0
    %58 = vmatpush1.msra.mxu0 0.0
    %59 = vmatprep.subr.mxu0 0.0
    %60 = vmatpush1.msra.mxu0 0.0
    %61 = vmatprep.subr.mxu0 0.0
    %62 = vmatpush1.msra.mxu0 0.0
    %63 = vmatprep.subr.mxu0 0.0
    %64 = vmatpush1.msra.mxu0 0.0
    %65 = vmatprep.subr.mxu0 0.0
    %66 = vmatpush1.msra.mxu0 0.0
    %67 = vmatprep.subr.mxu0 0.0
    %68 = vmatpush1.msra.mxu0 0.0
    %69 = vmatprep.subr.mxu0 0.0
    %70 = vmatpush1.msra.mxu0 0.0
    %71 = vmatprep.subr.mxu0 0.0
    %72 = vmatpush1.msra.mxu0 0.0
    %73 = vmatprep.subr.mxu0 0.0
    %74 = vmatpush1.msra.mxu0 0.0
    %75 = vmatprep.subr.mxu0 0.0
    %76 = vmatpush1.msra.mxu0 0.0
    %77 = vmatprep.subr.mxu0 0.0
    %78 = vmatpush1.msra.mxu0 0.0
    %79 = vmatprep.subr.mxu0 0.0
    %80 = vmatpush1.msra.mxu0 0.0
    %81 = vmatprep.subr.mxu0 0.0
    %82 = vmatpush1.msra.mxu0 0.0
    %83 = vmatprep.subr.mxu0 0.0
    %84 = vmatpush1.msra.mxu0 0.0
    %85 = vmatprep.subr.mxu0 0.0
    %86 = vmatpush1.msra.mxu0 0.0
    %87 = vmatprep.subr.mxu0 0.0
    %88 = vmatpush1.msra.mxu0 0.0
    %89 = vmatprep.subr.mxu0 0.0
    %90 = vmatpush1.msra.mxu0 0.0
    %91 = vmatprep.subr.mxu0 0.0
    %92 = vmatpush1.msra.mxu0 0.0
    %93 = vmatprep.subr.mxu0 0.0
    %94 = vmatpush1.msra.mxu0 0.0
    %95 = vmatprep.subr.mxu0 0.0
    %96 = vmatpush1.msra.mxu0 0.0
    %97 = vmatprep.subr.mxu0 0.0
    %98 = vmatpush1.msra.mxu0 0.0
    %99 = vmatprep.subr.mxu0 0.0
    %100 = vmatpush1.msra.mxu0 0.0
    %101 = vmatprep.subr.mxu0 0.0
    %102 = vmatpush1.msra.mxu0 0.0
    %103 = vmatprep.mubr.f32.mxu0 0.0
    %104 = vmatmul.mubr.f32.gmra.mrb[0].mxu0 %v28
    %v105 = vpop.f32.mrb[0].mxu0
    %v106 = vadd.f32 0.0, %v105
    %v107 = vpop.f32.mrb[0].mxu0
    %108 = vmatprep.mubr.f32.mxu0 0.0
    %109 = vmatmul.mubr.f32.gmra.mrb[0].mxu0 %v31
    %v110 = vpop.f32.mrb[0].mxu0
    %v111 = vadd.f32 0.0, %v110
    %v112 = vpop.f32.mrb[0].mxu0
    %113 = vmatprep.mubr.f32.mxu0 0.0
    %114 = vmatmul.mubr.f32.gmra.mrb[0].mxu0 %v34
    %v115 = vpop.f32.mrb[0].mxu0
    %v116 = vadd.f32 0.0, %v115
    %v117 = vpop.f32.mrb[0].mxu0
    %118 = vmatprep.mubr.f32.mxu0 0.0
    %119 = vmatmul.mubr.f32.gmra.mrb[0].mxu0 %v37
    %v120 = vpop.f32.mrb[0].mxu0
    %v121 = vadd.f32 0.0, %v120
    %v122 = vpop.f32.mrb[0].mxu0
    %123 = vdwg.mxu0
    %v124 = vlaneseq
    %v125 = vshrl.u32 %v124, 7
    %v126 = vadd.s32 %v125, 8
    %v127 = vadd.s32 %v125, 16
    %v128 = vadd.s32 %v125, 24
    %vm129 = vcmp.lt.s32.totalorder %v125, 0
    %v130 = vsub.s32 0, %v125
    %v131 = vsel %vm129, %v130, %v125
    %v132 = vshrl.u32 %v131, 4
    %v133 = vand.u32 %v131, 15
    %v134 = vsub.s32 0, %v133
    %v135 = vsel %vm129, %v134, %v133
    %vm136 = vcmp.lt.s32.totalorder %v126, 0
    %v137 = vsub.s32 0, %v126
    %v138 = vsel %vm136, %v137, %v126
    %v139 = vshrl.u32 %v138, 4
    %v140 = vand.u32 %v138, 15
    %v141 = vsub.s32 0, %v140
    %v142 = vsel %vm136, %v141, %v140
    %vm143 = vcmp.lt.s32.totalorder %v127, 0
    %v144 = vsub.s32 0, %v127
    %v145 = vsel %vm143, %v144, %v127
    %v146 = vshrl.u32 %v145, 4
    %v147 = vand.u32 %v145, 15
    %v148 = vsub.s32 0, %v147
    %v149 = vsel %vm143, %v148, %v147
    %vm150 = vcmp.lt.s32.totalorder %v128, 0
    %v151 = vsub.s32 0, %v128
    %v152 = vsel %vm150, %v151, %v128
    %v153 = vshrl.u32 %v152, 4
    %v154 = vand.u32 %v152, 15
    %v155 = vsub.s32 0, %v154
    %v156 = vsel %vm150, %v155, %v154
    %vm157 = vcmp.ne.s32.totalorder %v135, 0
    %vm158 = vcmp.ne.s32.totalorder %v142, 0
    %vm159 = vcmp.ne.s32.totalorder %v149, 0
    %vm160 = vcmp.ne.s32.totalorder %v156, 0
    %vm161 = vcmp.lt.s32.totalorder %v135, 0
    %vm162 = vcmp.lt.s32.totalorder %v142, 0
    %vm163 = vcmp.lt.s32.totalorder %v149, 0
    %vm164 = vcmp.lt.s32.totalorder %v156, 0
    %vm165 = vmand %vm161, %vm157
    %vm166 = vmand %vm162, %vm158
    %vm167 = vmand %vm163, %vm159
    %vm168 = vmand %vm164, %vm160
    %v169 = vadd.s32 %v135, 16
    %v170 = vadd.s32 %v142, 16
    %v171 = vadd.s32 %v149, 16
    %v172 = vadd.s32 %v156, 16
    %v173 = vsel %vm165, %v169, %v135
    %v174 = vsel %vm166, %v170, %v142
    %v175 = vsel %vm167, %v171, %v149
    %v176 = vsel %vm168, %v172, %v156
    %vm177 = vcmp.eq.s32.totalorder %v173, 0
    %vm178 = vcmp.eq.s32.totalorder %v174, 0
    %vm179 = vcmp.eq.s32.totalorder %v175, 0
    %vm180 = vcmp.eq.s32.totalorder %v176, 0
    %v181 = vrot.slane %v106, 7
    %v182 = vrot.slane %v111, 7
    %v183 = vrot.slane %v116, 7
    %v184 = vrot.slane %v121, 7
    %vm185 = vcmp.lt.s32.totalorder %v125, 1
    %v186 = vsel %vm185, %v183, %v184
    %v187 = vsel %vm185, %v182, %v183
    %v188 = vsel %vm185, %v181, %v182
    %v189 = vsel %vm185, %v184, %v181
    %v190 = vsel %vm177, 1, 0
    %v191 = vsel %vm178, 1, 0
    %v192 = vsel %vm179, 1, 0
    %v193 = vsel %vm180, 1, 0
    %vm194 = vcmp.eq.s32.totalorder %v190, 1
    %vm195 = vcmp.eq.s32.totalorder %v191, 1
    %vm196 = vcmp.eq.s32.totalorder %v192, 1
    %vm197 = vcmp.eq.s32.totalorder %v193, 1
    %v198 = vsel %vm194, 0.0, %v189
    %v199 = vsel %vm195, 0.0, %v188
    %v200 = vsel %vm196, 0.0, %v187
    %v201 = vsel %vm197, 0.0, %v186
    %vm202 = vcmp.eq.s32.totalorder %v173, 15
    %vm203 = vcmp.eq.s32.totalorder %v174, 15
    %vm204 = vcmp.eq.s32.totalorder %v175, 15
    %vm205 = vcmp.eq.s32.totalorder %v176, 15
    %210 = vrot.lane.b32.xlu0 %v106, 64
    %v211 = vpop.permute.xlu0 %210
    %212 = vrot.lane.b32.xlu0 %v111, 64
    %v213 = vpop.permute.xlu0 %212
    %214 = vrot.lane.b32.xlu0 %v116, 64
    %v215 = vpop.permute.xlu0 %214
    %216 = vrot.lane.b32.xlu0 %v121, 64
    %v217 = vpop.permute.xlu0 %216
    %v222 = vrot.slane %v211, 1
    %v223 = vrot.slane %v213, 1
    %v224 = vrot.slane %v215, 1
    %v225 = vrot.slane %v217, 1
    %vm226 = vcmp.lt.s32.totalorder %v125, 7
    %v227 = vsel %vm226, %v224, %v225
    %v228 = vsel %vm226, %v223, %v224
    %v229 = vsel %vm226, %v222, %v223
    %v230 = vsel %vm226, %v225, %v222
    %v231 = vsel %vm202, 1, 0
    %v232 = vsel %vm203, 1, 0
    %v233 = vsel %vm204, 1, 0
    %v234 = vsel %vm205, 1, 0
    %vm235 = vcmp.eq.s32.totalorder %v231, 1
    %vm236 = vcmp.eq.s32.totalorder %v232, 1
    %vm237 = vcmp.eq.s32.totalorder %v233, 1
    %vm238 = vcmp.eq.s32.totalorder %v234, 1
    %v239 = vsel %vm235, 0.0, %v229
    %v240 = vsel %vm236, 0.0, %v228
    %v241 = vsel %vm237, 0.0, %v227
    %v242 = vsel %vm238, 0.0, %v230
    %247 = vrot.lane.b32.xlu0 %v198, 32
    %v248 = vpop.permute.xlu0 %247
    %249 = vrot.lane.b32.xlu0 %v199, 32
    %v250 = vpop.permute.xlu0 %249
    %251 = vrot.lane.b32.xlu0 %v200, 32
    %v252 = vpop.permute.xlu0 %251
    %253 = vrot.lane.b32.xlu0 %v201, 32
    %v254 = vpop.permute.xlu0 %253
    %v259 = vadd.f32 %v106, %v248
    %v260 = vadd.f32 %v111, %v250
    %v261 = vadd.f32 %v116, %v252
    %v262 = vadd.f32 %v121, %v254
    %267 = vrot.lane.b32.xlu0 %v239, 32
    %v268 = vpop.permute.xlu0 %267
    %269 = vrot.lane.b32.xlu0 %v240, 32
    %v270 = vpop.permute.xlu0 %269
    %271 = vrot.lane.b32.xlu0 %v241, 32
    %v272 = vpop.permute.xlu0 %271
    %273 = vrot.lane.b32.xlu0 %v242, 32
    %v274 = vpop.permute.xlu0 %273
    %v279 = vadd.f32 %v259, %v268
    %v280 = vadd.f32 %v260, %v270
    %v281 = vadd.f32 %v261, %v272
    %v282 = vadd.f32 %v262, %v274
    %v283 = vadd.f32 %v279, 100.0
    %v284 = vadd.f32 %v280, 100.0
    %v285 = vadd.f32 %v281, 100.0
    %v286 = vadd.f32 %v282, 100.0
    %v287 = vld [vmem:[%s1] sm:$0x3]
    %v288 = vlaneseq
    %v289 = vshrl.u32 %v288, 7
    %v290 = vsub.s32 0, %v289
    %v291 = vrot.slane %v287, %v290
    %293 = vbcast.lane.b32.xlu0 %v291, 256
    %v294 = vpop.permute.xlu0 %293
    %s296 = sor.u32 256, 8
    %297 = vbcast.lane.b32.xlu0 %v291, %s296
    %v298 = vpop.permute.xlu0 %297
    %v299 = vlaneseq
    %v300 = vshrl.u32 %v299, 7
    %v301 = vsub.s32 1, %v300
    %v302 = vrot.slane %v287, %v301
    %304 = vbcast.lane.b32.xlu0 %v302, 256
    %v305 = vpop.permute.xlu0 %304
    %s307 = sor.u32 256, 8
    %308 = vbcast.lane.b32.xlu0 %v302, %s307
    %v309 = vpop.permute.xlu0 %308
    %vm310 = vcmp.eq.s32.totalorder %v294, 0
    %vm311 = vcmp.eq.s32.totalorder %v298, 0
    %vm312 = vcmp.eq.s32.totalorder %v305, 0
    %vm313 = vcmp.eq.s32.totalorder %v309, 0
    %v314 = vsel %vm310, 1, 0
    %v315 = vsel %vm311, 1, 0
    %v316 = vsel %vm312, 1, 0
    %v317 = vsel %vm313, 1, 0
    %vm318 = vcmp.eq.s32.totalorder %v314, 1
    %vm319 = vcmp.eq.s32.totalorder %v315, 1
    %vm320 = vcmp.eq.s32.totalorder %v316, 1
    %vm321 = vcmp.eq.s32.totalorder %v317, 1
    %v322 = vsel %vm318, %v283, %v279
    %v323 = vsel %vm319, %v284, %v280
    %v324 = vsel %vm320, %v285, %v281
    %v325 = vsel %vm321, %v286, %v282
    %vm326 = vcmask 523520
    %v327 = vsel %vm326, %v322, -inf
    %v328 = vsel %vm326, %v323, -inf
    %v329 = vmax.f32 %v327, %v328
    %v330 = vrot.slane %v329, 4
    %v331 = vmax.f32 %v329, %v330
    %v332 = vrot.slane %v331, 2
    %v333 = vmax.f32 %v331, %v332
    %v334 = vrot.slane %v333, 1
    %v335 = vmax.f32 %v333, %v334
    %v336 = vsel %vm326, %v324, -inf
    %v337 = vsel %vm326, %v325, -inf
    %v338 = vmax.f32 %v336, %v337
    %v339 = vrot.slane %v338, 4
    %v340 = vmax.f32 %v338, %v339
    %v341 = vrot.slane %v340, 2
    %v342 = vmax.f32 %v340, %v341
    %v343 = vrot.slane %v342, 1
    %v344 = vmax.f32 %v342, %v343
    %vm345 = vcmp.eq.s32.totalorder %v294, 1
    %vm346 = vcmp.eq.s32.totalorder %v298, 1
    %vm347 = vcmp.eq.s32.totalorder %v305, 1
    %vm348 = vcmp.eq.s32.totalorder %v309, 1
    %v349 = vsel %vm345, 1, 0
    %v350 = vsel %vm346, 1, 0
    %v351 = vsel %vm347, 1, 0
    %v352 = vsel %vm348, 1, 0
    %vm353 = vcmp.eq.s32.totalorder %v349, 1
    %vm354 = vcmp.eq.s32.totalorder %v350, 1
    %vm355 = vcmp.eq.s32.totalorder %v351, 1
    %vm356 = vcmp.eq.s32.totalorder %v352, 1
    %v357 = vsel %vm353, %v283, %v279
    %v358 = vsel %vm354, %v284, %v280
    %v359 = vsel %vm355, %v285, %v281
    %v360 = vsel %vm356, %v286, %v282
    %v361 = vsel %vm326, %v357, -inf
    %v362 = vsel %vm326, %v358, -inf
    %v363 = vmax.f32 %v361, %v362
    %v364 = vrot.slane %v363, 4
    %v365 = vmax.f32 %v363, %v364
    %v366 = vrot.slane %v365, 2
    %v367 = vmax.f32 %v365, %v366
    %v368 = vrot.slane %v367, 1
    %v369 = vmax.f32 %v367, %v368
    %v370 = vsel %vm326, %v359, -inf
    %v371 = vsel %vm326, %v360, -inf
    %v372 = vmax.f32 %v370, %v371
    %v373 = vrot.slane %v372, 4
    %v374 = vmax.f32 %v372, %v373
    %v375 = vrot.slane %v374, 2
    %v376 = vmax.f32 %v374, %v375
    %v377 = vrot.slane %v376, 1
    %v378 = vmax.f32 %v376, %v377
    %vm379 = vcmp.eq.s32.totalorder %v294, 2
    %vm380 = vcmp.eq.s32.totalorder %v298, 2
    %vm381 = vcmp.eq.s32.totalorder %v305, 2
    %vm382 = vcmp.eq.s32.totalorder %v309, 2
    %v383 = vsel %vm379, 1, 0
    %v384 = vsel %vm380, 1, 0
    %v385 = vsel %vm381, 1, 0
    %v386 = vsel %vm382, 1, 0
    %vm387 = vcmp.eq.s32.totalorder %v383, 1
    %vm388 = vcmp.eq.s32.totalorder %v384, 1
    %vm389 = vcmp.eq.s32.totalorder %v385, 1
    %vm390 = vcmp.eq.s32.totalorder %v386, 1
    %v391 = vsel %vm387, %v283, %v279
    %v392 = vsel %vm388, %v284, %v280
    %v393 = vsel %vm389, %v285, %v281
    %v394 = vsel %vm390, %v286, %v282
    %v395 = vsel %vm326, %v391, -inf
    %v396 = vsel %vm326, %v392, -inf
    %v397 = vmax.f32 %v395, %v396
    %v398 = vrot.slane %v397, 4
    %v399 = vmax.f32 %v397, %v398
    %v400 = vrot.slane %v399, 2
    %v401 = vmax.f32 %v399, %v400
    %v402 = vrot.slane %v401, 1
    %v403 = vmax.f32 %v401, %v402
    %v404 = vsel %vm326, %v393, -inf
    %v405 = vsel %vm326, %v394, -inf
    %v406 = vmax.f32 %v404, %v405
    %v407 = vrot.slane %v406, 4
    %v408 = vmax.f32 %v406, %v407
    %v409 = vrot.slane %v408, 2
    %v410 = vmax.f32 %v408, %v409
    %v411 = vrot.slane %v410, 1
    %v412 = vmax.f32 %v410, %v411
    %v413 = vlaneseq
    %v414 = vand.u32 %v413, 127
    %v415 = vld [vmem:[%s3] sm:$0x1]
    %v416 = vmul.u32 %v125, 3
    %v417 = vmul.u32 %v126, 3
    %v418 = vmul.u32 %v127, 3
    %v419 = vmul.u32 %v128, 3
    %vm420 = vcmp.eq.s32.totalorder %v414, %v416
    %vm421 = vcmp.eq.s32.totalorder %v414, %v417
    %vm422 = vcmp.eq.s32.totalorder %v414, %v418
    %vm423 = vcmp.eq.s32.totalorder %v414, %v419
    %v424 = vsel %vm420, 1, 0
    %v425 = vsel %vm421, 1, 0
    %v426 = vsel %vm422, 1, 0
    %v427 = vsel %vm423, 1, 0
    %v428 = vcvt.s32.f32 %v424
    %v429 = vcvt.s32.f32 %v425
    %v430 = vcvt.s32.f32 %v426
    %v431 = vcvt.s32.f32 %v427
    %vm434 = vcmask 1041409
    %v435 = vsel %vm434, %v344, %v335
    %436 = vrot.lane.b32.xlu0 %v435, 96
    %v437 = vpop.permute.xlu0 %436
    %v438 = vsel %vm26, %v437, 0
    %440 = vmatprep.subr.mxu0 0.0
    %441 = vmatpush1.msra.mxu0 %v428
    %442 = vmatprep.subr.mxu0 0.0
    %443 = vmatpush1.msra.mxu0 %v429
    %444 = vmatprep.subr.mxu0 0.0
    %445 = vmatpush1.msra.mxu0 %v430
    %446 = vmatprep.subr.mxu0 0.0
    %447 = vmatpush1.msra.mxu0 %v431
    %448 = vmatprep.subr.mxu0 0.0
    %449 = vmatpush1.msra.mxu0 0.0
    %450 = vmatprep.subr.mxu0 0.0
    %451 = vmatpush1.msra.mxu0 0.0
    %452 = vmatprep.subr.mxu0 0.0
    %453 = vmatpush1.msra.mxu0 0.0
    %454 = vmatprep.subr.mxu0 0.0
    %455 = vmatpush1.msra.mxu0 0.0
    %456 = vmatprep.subr.mxu0 0.0
    %457 = vmatpush1.msra.mxu0 0.0
    %458 = vmatprep.subr.mxu0 0.0
    %459 = vmatpush1.msra.mxu0 0.0
    %460 = vmatprep.subr.mxu0 0.0
    %461 = vmatpush1.msra.mxu0 0.0
    %462 = vmatprep.subr.mxu0 0.0
    %463 = vmatpush1.msra.mxu0 0.0
    %464 = vmatprep.subr.mxu0 0.0
    %465 = vmatpush1.msra.mxu0 0.0
    %466 = vmatprep.subr.mxu0 0.0
    %467 = vmatpush1.msra.mxu0 0.0
    %468 = vmatprep.subr.mxu0 0.0
    %469 = vmatpush1.msra.mxu0 0.0
    %470 = vmatprep.subr.mxu0 0.0
    %471 = vmatpush1.msra.mxu0 0.0
    %472 = vmatprep.subr.mxu0 0.0
    %473 = vmatpush1.msra.mxu0 0.0
    %474 = vmatprep.subr.mxu0 0.0
    %475 = vmatpush1.msra.mxu0 0.0
    %476 = vmatprep.subr.mxu0 0.0
    %477 = vmatpush1.msra.mxu0 0.0
    %478 = vmatprep.subr.mxu0 0.0
    %479 = vmatpush1.msra.mxu0 0.0
    %480 = vmatprep.subr.mxu0 0.0
    %481 = vmatpush1.msra.mxu0 0.0
    %482 = vmatprep.subr.mxu0 0.0
    %483 = vmatpush1.msra.mxu0 0.0
    %484 = vmatprep.subr.mxu0 0.0
    %485 = vmatpush1.msra.mxu0 0.0
    %486 = vmatprep.subr.mxu0 0.0
    %487 = vmatpush1.msra.mxu0 0.0
    %488 = vmatprep.subr.mxu0 0.0
    %489 = vmatpush1.msra.mxu0 0.0
    %490 = vmatprep.subr.mxu0 0.0
    %491 = vmatpush1.msra.mxu0 0.0
    %492 = vmatprep.subr.mxu0 0.0
    %493 = vmatpush1.msra.mxu0 0.0
    %494 = vmatprep.subr.mxu0 0.0
    %495 = vmatpush1.msra.mxu0 0.0
    %496 = vmatprep.subr.mxu0 0.0
    %497 = vmatpush1.msra.mxu0 0.0
    %498 = vmatprep.subr.mxu0 0.0
    %499 = vmatpush1.msra.mxu0 0.0
    %500 = vmatprep.subr.mxu0 0.0
    %501 = vmatpush1.msra.mxu0 0.0
    %502 = vmatprep.subr.mxu0 0.0
    %503 = vmatpush1.msra.mxu0 0.0
    %504 = vmatprep.mubr.f32.mxu0 0.0
    %505 = vmatmul.mubr.f32.gmra.mrb[0].mxu0 %v438
    %v506 = vpop.f32.mrb[0].mxu0
    %v507 = vadd.f32 0.0, %v506
    %v508 = vpop.f32.mrb[0].mxu0
    %509 = vdwg.mxu0
    %v511 = vlaneseq
    %v512 = vshrl.u32 %v511, 7
    %v513 = vsub.s32 0, %v512
    %v514 = vrot.slane %v415, %v513
    %v516 = vadd.f32 %v514, %v507
    %v517 = vadd.s32 %v416, 1
    %v518 = vadd.s32 %v417, 1
    %v519 = vadd.s32 %v418, 1
    %v520 = vadd.s32 %v419, 1
    %vm521 = vcmp.eq.s32.totalorder %v414, %v517
    %vm522 = vcmp.eq.s32.totalorder %v414, %v518
    %vm523 = vcmp.eq.s32.totalorder %v414, %v519
    %vm524 = vcmp.eq.s32.totalorder %v414, %v520
    %v525 = vsel %vm521, 1, 0
    %v526 = vsel %vm522, 1, 0
    %v527 = vsel %vm523, 1, 0
    %v528 = vsel %vm524, 1, 0
    %v529 = vcvt.s32.f32 %v525
    %v530 = vcvt.s32.f32 %v526
    %v531 = vcvt.s32.f32 %v527
    %v532 = vcvt.s32.f32 %v528
    %v535 = vsel %vm434, %v378, %v369
    %536 = vrot.lane.b32.xlu0 %v535, 96
    %v537 = vpop.permute.xlu0 %536
    %v538 = vsel %vm26, %v537, 0
    %540 = vmatprep.subr.mxu0 0.0
    %541 = vmatpush1.msra.mxu0 %v529
    %542 = vmatprep.subr.mxu0 0.0
    %543 = vmatpush1.msra.mxu0 %v530
    %544 = vmatprep.subr.mxu0 0.0
    %545 = vmatpush1.msra.mxu0 %v531
    %546 = vmatprep.subr.mxu0 0.0
    %547 = vmatpush1.msra.mxu0 %v532
    %548 = vmatprep.subr.mxu0 0.0
    %549 = vmatpush1.msra.mxu0 0.0
    %550 = vmatprep.subr.mxu0 0.0
    %551 = vmatpush1.msra.mxu0 0.0
    %552 = vmatprep.subr.mxu0 0.0
    %553 = vmatpush1.msra.mxu0 0.0
    %554 = vmatprep.subr.mxu0 0.0
    %555 = vmatpush1.msra.mxu0 0.0
    %556 = vmatprep.subr.mxu0 0.0
    %557 = vmatpush1.msra.mxu0 0.0
    %558 = vmatprep.subr.mxu0 0.0
    %559 = vmatpush1.msra.mxu0 0.0
    %560 = vmatprep.subr.mxu0 0.0
    %561 = vmatpush1.msra.mxu0 0.0
    %562 = vmatprep.subr.mxu0 0.0
    %563 = vmatpush1.msra.mxu0 0.0
    %564 = vmatprep.subr.mxu0 0.0
    %565 = vmatpush1.msra.mxu0 0.0
    %566 = vmatprep.subr.mxu0 0.0
    %567 = vmatpush1.msra.mxu0 0.0
    %568 = vmatprep.subr.mxu0 0.0
    %569 = vmatpush1.msra.mxu0 0.0
    %570 = vmatprep.subr.mxu0 0.0
    %571 = vmatpush1.msra.mxu0 0.0
    %572 = vmatprep.subr.mxu0 0.0
    %573 = vmatpush1.msra.mxu0 0.0
    %574 = vmatprep.subr.mxu0 0.0
    %575 = vmatpush1.msra.mxu0 0.0
    %576 = vmatprep.subr.mxu0 0.0
    %577 = vmatpush1.msra.mxu0 0.0
    %578 = vmatprep.subr.mxu0 0.0
    %579 = vmatpush1.msra.mxu0 0.0
    %580 = vmatprep.subr.mxu0 0.0
    %581 = vmatpush1.msra.mxu0 0.0
    %582 = vmatprep.subr.mxu0 0.0
    %583 = vmatpush1.msra.mxu0 0.0
    %584 = vmatprep.subr.mxu0 0.0
    %585 = vmatpush1.msra.mxu0 0.0
    %586 = vmatprep.subr.mxu0 0.0
    %587 = vmatpush1.msra.mxu0 0.0
    %588 = vmatprep.subr.mxu0 0.0
    %589 = vmatpush1.msra.mxu0 0.0
    %590 = vmatprep.subr.mxu0 0.0
    %591 = vmatpush1.msra.mxu0 0.0
    %592 = vmatprep.subr.mxu0 0.0
    %593 = vmatpush1.msra.mxu0 0.0
    %594 = vmatprep.subr.mxu0 0.0
    %595 = vmatpush1.msra.mxu0 0.0
    %596 = vmatprep.subr.mxu0 0.0
    %597 = vmatpush1.msra.mxu0 0.0
    %598 = vmatprep.subr.mxu0 0.0
    %599 = vmatpush1.msra.mxu0 0.0
    %600 = vmatprep.subr.mxu0 0.0
    %601 = vmatpush1.msra.mxu0 0.0
    %602 = vmatprep.subr.mxu0 0.0
    %603 = vmatpush1.msra.mxu0 0.0
    %604 = vmatprep.mubr.f32.mxu0 0.0
    %605 = vmatmul.mubr.f32.gmra.mrb[0].mxu0 %v538
    %v606 = vpop.f32.mrb[0].mxu0
    %v607 = vadd.f32 0.0, %v606
    %v608 = vpop.f32.mrb[0].mxu0
    %609 = vdwg.mxu0
    %v610 = vadd.f32 %v516, %v607
    %v611 = vadd.s32 %v416, 2
    %v612 = vadd.s32 %v417, 2
    %v613 = vadd.s32 %v418, 2
    %v614 = vadd.s32 %v419, 2
    %vm615 = vcmp.eq.s32.totalorder %v414, %v611
    %vm616 = vcmp.eq.s32.totalorder %v414, %v612
    %vm617 = vcmp.eq.s32.totalorder %v414, %v613
    %vm618 = vcmp.eq.s32.totalorder %v414, %v614
    %v619 = vsel %vm615, 1, 0
    %v620 = vsel %vm616, 1, 0
    %v621 = vsel %vm617, 1, 0
    %v622 = vsel %vm618, 1, 0
    %v623 = vcvt.s32.f32 %v619
    %v624 = vcvt.s32.f32 %v620
    %v625 = vcvt.s32.f32 %v621
    %v626 = vcvt.s32.f32 %v622
    %v629 = vsel %vm434, %v412, %v403
    %630 = vrot.lane.b32.xlu0 %v629, 96
    %v631 = vpop.permute.xlu0 %630
    %v632 = vsel %vm26, %v631, 0
    %634 = vmatprep.subr.mxu0 0.0
    %635 = vmatpush1.msra.mxu0 %v623
    %636 = vmatprep.subr.mxu0 0.0
    %637 = vmatpush1.msra.mxu0 %v624
    %638 = vmatprep.subr.mxu0 0.0
    %639 = vmatpush1.msra.mxu0 %v625
    %640 = vmatprep.subr.mxu0 0.0
    %641 = vmatpush1.msra.mxu0 %v626
    %642 = vmatprep.subr.mxu0 0.0
    %643 = vmatpush1.msra.mxu0 0.0
    %644 = vmatprep.subr.mxu0 0.0
    %645 = vmatpush1.msra.mxu0 0.0
    %646 = vmatprep.subr.mxu0 0.0
    %647 = vmatpush1.msra.mxu0 0.0
    %648 = vmatprep.subr.mxu0 0.0
    %649 = vmatpush1.msra.mxu0 0.0
    %650 = vmatprep.subr.mxu0 0.0
    %651 = vmatpush1.msra.mxu0 0.0
    %652 = vmatprep.subr.mxu0 0.0
    %653 = vmatpush1.msra.mxu0 0.0
    %654 = vmatprep.subr.mxu0 0.0
    %655 = vmatpush1.msra.mxu0 0.0
    %656 = vmatprep.subr.mxu0 0.0
    %657 = vmatpush1.msra.mxu0 0.0
    %658 = vmatprep.subr.mxu0 0.0
    %659 = vmatpush1.msra.mxu0 0.0
    %660 = vmatprep.subr.mxu0 0.0
    %661 = vmatpush1.msra.mxu0 0.0
    %662 = vmatprep.subr.mxu0 0.0
    %663 = vmatpush1.msra.mxu0 0.0
    %664 = vmatprep.subr.mxu0 0.0
    %665 = vmatpush1.msra.mxu0 0.0
    %666 = vmatprep.subr.mxu0 0.0
    %667 = vmatpush1.msra.mxu0 0.0
    %668 = vmatprep.subr.mxu0 0.0
    %669 = vmatpush1.msra.mxu0 0.0
    %670 = vmatprep.subr.mxu0 0.0
    %671 = vmatpush1.msra.mxu0 0.0
    %672 = vmatprep.subr.mxu0 0.0
    %673 = vmatpush1.msra.mxu0 0.0
    %674 = vmatprep.subr.mxu0 0.0
    %675 = vmatpush1.msra.mxu0 0.0
    %676 = vmatprep.subr.mxu0 0.0
    %677 = vmatpush1.msra.mxu0 0.0
    %678 = vmatprep.subr.mxu0 0.0
    %679 = vmatpush1.msra.mxu0 0.0
    %680 = vmatprep.subr.mxu0 0.0
    %681 = vmatpush1.msra.mxu0 0.0
    %682 = vmatprep.subr.mxu0 0.0
    %683 = vmatpush1.msra.mxu0 0.0
    %684 = vmatprep.subr.mxu0 0.0
    %685 = vmatpush1.msra.mxu0 0.0
    %686 = vmatprep.subr.mxu0 0.0
    %687 = vmatpush1.msra.mxu0 0.0
    %688 = vmatprep.subr.mxu0 0.0
    %689 = vmatpush1.msra.mxu0 0.0
    %690 = vmatprep.subr.mxu0 0.0
    %691 = vmatpush1.msra.mxu0 0.0
    %692 = vmatprep.subr.mxu0 0.0
    %693 = vmatpush1.msra.mxu0 0.0
    %694 = vmatprep.subr.mxu0 0.0
    %695 = vmatpush1.msra.mxu0 0.0
    %696 = vmatprep.subr.mxu0 0.0
    %697 = vmatpush1.msra.mxu0 0.0
    %698 = vmatprep.mubr.f32.mxu0 0.0
    %699 = vmatmul.mubr.f32.gmra.mrb[0].mxu0 %v632
    %v700 = vpop.f32.mrb[0].mxu0
    %v701 = vadd.f32 0.0, %v700
    %v702 = vpop.f32.mrb[0].mxu0
    %703 = vdwg.mxu0
    %v704 = vadd.f32 %v610, %v701
    %v705 = vmax.f32 %v704, 0.0
    %vm706 = vcmask 779264
    %707 = vst.msk [vmem:[#allocation2] sm:$0x3] %vm706, %v705
    // Predicated region
    $region18: #{pcnn_forward.1} parent=1 // pred_check
      _
    $region19: #{pcnn_forward.1} parent=1 // pred_check_branch
      %709 = sbr.rel (0) target = $region21
    $region20: #{pcnn_forward.1} parent=1 // pred_region
      %s711 = ssub.s32 32, 32
      %712 = vsyncadd [#allocation3], %s711
      %s714 = sshll.u32 [#allocation2], 4
      %s715 = int_to_ptr.vmem [resolvable:$true] %s714
      %717 = dma.vmem_to_hbm [thread:$0]  %s715, 32, %s4, [#allocation3]
    $region21: #{pcnn_forward.1} parent=1 // pred_fallthru
      _
    // Predicated region
    $region22: #{pcnn_forward.1} parent=1 // pred_check
      _
    $region23: #{pcnn_forward.1} parent=1 // pred_check_branch
      %719 = sbr.rel (0) target = $region25
    $region24: #{pcnn_forward.1} parent=1 // pred_region
      %720 = dma.done [#allocation3], 32
    $region25: #{pcnn_forward.1} parent=1 // pred_fallthru
      _
    %721 = vsyncpa [#allocation3], 1

</llo_original>
